<compile_context>
chip_gen: v6e
topology: v6e:2x2x1
jax: 0.10.0
libtpu: 0.0.40
codegen_flags: <defaults>
</compile_context>

<pallas_src>
import functools

import jax
import jax.numpy as jnp
from jax.experimental import pallas as pl
from jax.experimental.pallas import tpu as pltpu


def _round_up(x, m):
    return ((x + m - 1) // m) * m


def bow_kernel(counts_ref, emb_ref, w_ref, b_ref, out_ref, acc_ref, *, inv_len):
    """One (B_TILE, V_TILE) step of  scores = (counts/L) @ emb @ W^T + b."""
    vj = pl.program_id(1)

    @pl.when(vj == 0)
    def _init():
        acc_ref[...] = jnp.zeros_like(acc_ref)

    # counts arrive compressed (int8/bf16) to shrink the dominant HBM stream;
    # the widening cast rides idle VPU slots, the dot and accumulate stay f32.
    counts = counts_ref[...].astype(jnp.float32)
    acc_ref[...] += jnp.dot(counts, emb_ref[...],
                            preferred_element_type=jnp.float32)      # (B_TILE, E)

    @pl.when(vj == pl.num_programs(1) - 1)
    def _finalize():
        # mean over L: fold the 1/L scale into one multiply of the accumulator.
        cbow = acc_ref[...] * inv_len
        # dropout(p=0.5) is identity in eval mode (matches module forward at inference).
        out_ref[...] = jnp.dot(cbow, w_ref[...],
                               preferred_element_type=jnp.float32) + b_ref[...]


def bow_classifier_forward(docs, emb_table, w, b):
    """docs: (L, B) int32; emb_table: (V, E) f32; w: (C, E); b: (C,) -> (B, C) f32."""
    L, B = docs.shape
    V, E = emb_table.shape
    C = w.shape[0]

    # --- dtype for the counts stream (the dominant HBM traffic) --------------
    # Per-(doc, token) counts are bounded by L, so:
    #   L <= 127 -> int8 exact (4x fewer bytes than f32)
    #   L <= 256 -> bf16 exact for integer counts       (2x fewer bytes)
    #   else     -> f32 fallback
    if L <= 127:
        counts_dtype, sub = jnp.int8, 32      # int8 native tile is (32, 128)
    elif L <= 256:
        counts_dtype, sub = jnp.bfloat16, 16  # bf16 native tile is (16, 128)
    else:
        counts_dtype, sub = jnp.float32, 8

    # --- tile / pad sizes -----------------------------------------------------
    B_pad_min = _round_up(B, sub)
    if B_pad_min >= 2 * sub:
        # Keep >= 2 B tiles so both v7x TensorCores get work (v5e/v6e unaffected),
        # while capping at 256 rows per MXU M-tile for large batches.
        B_TILE = min(256, _round_up(B_pad_min // 2, sub))
    else:
        B_TILE = B_pad_min
    B_pad = _round_up(B_pad_min, B_TILE)

    V_pad128 = _round_up(V, 128)
    V_TILE = min(2048, V_pad128)              # large reduction tile: fewer, bigger DMAs
    V_pad = _round_up(V_pad128, V_TILE)

    C_pad = _round_up(C, 128)                 # lane-dense output -> unmasked vst

    # --- BoW reformulation: token counts per document (no (L,B,E) gather slab) -
    # NOTE: out-of-range token ids are silently dropped by the scatter (PyTorch
    # would raise); ids are assumed valid here.
    # TODO(synk): for production vocabs (V_pad >> 2*L*E) replace the dense counts
    # matrix with a scalar-prefetched row gather of the embedding table; the
    # counts formulation only wins at small V like this toy config.
    batch_idx = jnp.broadcast_to(
        jnp.arange(B, dtype=jnp.int32)[None, :], (L, B)).ravel()
    counts = (jnp.zeros((B_pad, V_pad), jnp.int32)
              .at[batch_idx, docs.ravel()].add(1)).astype(counts_dtype)

    # Zero padding keeps the math exact (padding_idx row is already zero).
    # (emb_p / w_p stay f32 to match the f32 reference within 1e-5; casting them
    #  to bf16 would halve that secondary HBM stream if ~1e-3 error is tolerable.)
    emb_p = jnp.zeros((V_pad, E), jnp.float32).at[:V, :].set(
        emb_table.astype(jnp.float32))
    w_p = jnp.zeros((E, C_pad), jnp.float32).at[:, :C].set(w.T.astype(jnp.float32))
    b_p = jnp.zeros((1, C_pad), jnp.float32).at[0, :C].set(b.astype(jnp.float32))

    grid = (B_pad // B_TILE, V_pad // V_TILE)
    n_b_tiles = grid[0]

    counts_bytes = jnp.dtype(counts_dtype).itemsize
    flops = 2 * B_pad * V_pad * E + 2 * B_pad * E * C_pad
    bytes_accessed = (B_pad * V_pad * counts_bytes          # counts, read once
                      + n_b_tiles * V_pad * E * 4           # emb re-streamed per B tile
                      + E * C_pad * 4 + C_pad * 4           # W^T + bias
                      + B_pad * C_pad * 4)                  # output

    out_padded = pl.pallas_call(
        functools.partial(bow_kernel, inv_len=1.0 / L),
        out_shape=jax.ShapeDtypeStruct((B_pad, C_pad), jnp.float32),
        grid_spec=pltpu.PrefetchScalarGridSpec(
            num_scalar_prefetch=0,
            grid=grid,
            in_specs=[
                pl.BlockSpec((B_TILE, V_TILE), lambda i, j: (i, j)),   # counts
                pl.BlockSpec((V_TILE, E), lambda i, j: (j, 0)),        # emb table
                pl.BlockSpec((E, C_pad), lambda i, j: (0, 0)),         # W^T
                pl.BlockSpec((1, C_pad), lambda i, j: (0, 0)),         # bias
            ],
            out_specs=pl.BlockSpec((B_TILE, C_pad), lambda i, j: (i, 0)),
            scratch_shapes=[pltpu.VMEM((B_TILE, E), jnp.float32)],
        ),
        compiler_params=pltpu.CompilerParams(
            # B tiles shard across TensorCores (v7x megacore); V is the reduction.
            dimension_semantics=("parallel", "arbitrary"),
            # Explicit limit: legal on v5e's lower 16 MiB default, under v7x's
            # 64 MiB physical; per-step double-buffered tiles are ~1-2 MiB.
            vmem_limit_bytes=32 * 1024 * 1024,
        ),
        cost_estimate=pl.CostEstimate(
            flops=int(flops), transcendentals=0,
            bytes_accessed=int(bytes_accessed)),
    )(counts, emb_p, w_p, b_p)

    return out_padded[:B, :C]


if __name__ == "__main__":
    # Small shapes consistent with the module.
    vocab_size = 50       # vocab_size
    num_classes = 8       # class_field_vocab
    emb_dim = 32          # emb_dim
    seq_len = 8           # L (reduced over by mean(dim=0))
    batch = 2             # B

    key = jax.random.PRNGKey(0)
    k_emb, k_w, k_b, k_docs = jax.random.split(key, 4)

    # nn.Embedding(vocab_size, emb_dim, padding_idx=0): normal init, row 0 zeroed.
    emb_table = jax.random.normal(k_emb, (vocab_size, emb_dim), dtype=jnp.float32)
    emb_table = emb_table.at[0].set(0.0)

    # nn.Linear(emb_dim, num_classes): weight (C, E), bias (C,).
    bound = 1.0 / jnp.sqrt(emb_dim)
    w = jax.random.uniform(k_w, (num_classes, emb_dim),
                           minval=-bound, maxval=bound, dtype=jnp.float32)
    b = jax.random.uniform(k_b, (num_classes,),
                           minval=-bound, maxval=bound, dtype=jnp.float32)

    # docs: (L, B) token ids, include some padding (0) tokens.
    docs = jax.random.randint(k_docs, (seq_len, batch), 0, vocab_size, dtype=jnp.int32)

    scores = bow_classifier_forward(docs, emb_table, w, b)
    scores = jax.block_until_ready(scores)

    # Pure-JAX reference (eval-mode dropout == identity).
    embedded_ref = jnp.take(emb_table, docs, axis=0)          # (L, B, E)
    ref = jnp.mean(embedded_ref, axis=0) @ w.T + b            # (B, C)
    assert scores.shape == (batch, num_classes)
    assert jnp.allclose(scores, ref, atol=1e-5, rtol=1e-5)

    print("KERNEL_OK")
</pallas_src>

<mosaic_0001>
module attributes {stable_mosaic.version = 11 : i64} {
  func.func @bow_kernel(%arg0: i32, %arg1: i32, %arg2: memref<32x128xi8, #tpu.memory_space<vmem>>, %arg3: memref<128x32xf32, #tpu.memory_space<vmem>>, %arg4: memref<32x128xf32, #tpu.memory_space<vmem>>, %arg5: memref<1x128xf32, #tpu.memory_space<vmem>>, %arg6: memref<32x128xf32, #tpu.memory_space<vmem>>, %arg7: memref<32x32xf32, #tpu.memory_space<vmem>>) attributes {dimension_semantics = [#tpu.dimension_semantics<parallel>, #tpu.dimension_semantics<arbitrary>], iteration_bounds = array<i64: 1, 1>, scalar_prefetch = 0 : i64, scratch_operands = 1 : i64, tpu.core_type = #tpu.core_type<tc>, window_params = [{transform_indices = @transform_0, window_bounds = array<i64: 32, 128>}, {transform_indices = @transform_1, window_bounds = array<i64: 128, 32>}, {pipeline_mode = #tpu.pipeline_mode<synchronous>, transform_indices = @transform_2, window_bounds = array<i64: 32, 128>}, {pipeline_mode = #tpu.pipeline_mode<synchronous>, transform_indices = @transform_3, window_bounds = array<i64: 1, 128>}, {transform_indices = @transform_4, window_bounds = array<i64: 32, 128>}]} {
    %c0_i32 = arith.constant 0 : i32
    %0 = arith.cmpi eq, %arg1, %c0_i32 : i32
    %1 = arith.extui %0 : i1 to i32
    %c0_i32_0 = arith.constant 0 : i32
    %2 = arith.cmpi ne, %1, %c0_i32_0 : i32
    scf.if %2 {
      %cst_10 = arith.constant 0.000000e+00 : f32
      %13 = vector.broadcast %cst_10 : f32 to vector<32x32xf32>
      %c0_11 = arith.constant 0 : index
      %c0_12 = arith.constant 0 : index
      %14 = vector.load %arg7[%c0_11, %c0_12] : memref<32x32xf32, #tpu.memory_space<vmem>>, vector<32x32xf32>
      tpu.vector_store %arg7[%c0_11, %c0_12], %13 {strides = array<i32>} : memref<32x32xf32, #tpu.memory_space<vmem>>, vector<32x32xf32>,
    } else {
    }
    %c0 = arith.constant 0 : index
    %c0_1 = arith.constant 0 : index
    %3 = vector.load %arg2[%c0, %c0_1] : memref<32x128xi8, #tpu.memory_space<vmem>>, vector<32x128xi8>
    %4 = arith.sitofp %3 : vector<32x128xi8> to vector<32x128xf32>
    %c0_2 = arith.constant 0 : index
    %c0_3 = arith.constant 0 : index
    %5 = vector.load %arg7[%c0_2, %c0_3] : memref<32x32xf32, #tpu.memory_space<vmem>>, vector<32x32xf32>
    %c0_4 = arith.constant 0 : index
    %c0_5 = arith.constant 0 : index
    %6 = vector.load %arg3[%c0_4, %c0_5] : memref<128x32xf32, #tpu.memory_space<vmem>>, vector<128x32xf32>
    %cst = arith.constant dense<0.000000e+00> : vector<32x32xf32>
    %7 = tpu.matmul %4, %6, %cst {dimension_numbers = #tpu.dot_dimension_numbers<[1], [0], [0], [1], [0, 0, 1, 1], [], []>} : vector<32x128xf32>, vector<128x32xf32>, vector<32x32xf32> -> vector<32x32xf32>
    %8 = arith.addf %5, %7 : vector<32x32xf32>
    %c0_6 = arith.constant 0 : index
    %c0_7 = arith.constant 0 : index
    %9 = vector.load %arg7[%c0_6, %c0_7] : memref<32x32xf32, #tpu.memory_space<vmem>>, vector<32x32xf32>
    tpu.vector_store %arg7[%c0_6, %c0_7], %8 {strides = array<i32>} : memref<32x32xf32, #tpu.memory_space<vmem>>, vector<32x32xf32>,
    %c0_i32_8 = arith.constant 0 : i32
    %10 = arith.cmpi eq, %arg1, %c0_i32_8 : i32
    %11 = arith.extui %10 : i1 to i32
    %c0_i32_9 = arith.constant 0 : i32
    %12 = arith.cmpi ne, %11, %c0_i32_9 : i32
    scf.if %12 {
      %c0_10 = arith.constant 0 : index
      %c0_11 = arith.constant 0 : index
      %13 = vector.load %arg7[%c0_10, %c0_11] : memref<32x32xf32, #tpu.memory_space<vmem>>, vector<32x32xf32>
      %cst_12 = arith.constant 1.250000e-01 : f32
      %14 = vector.broadcast %cst_12 : f32 to vector<32x32xf32>
      %15 = arith.mulf %13, %14 : vector<32x32xf32>
      %c0_13 = arith.constant 0 : index
      %c0_14 = arith.constant 0 : index
      %16 = vector.load %arg4[%c0_13, %c0_14] : memref<32x128xf32, #tpu.memory_space<vmem>>, vector<32x128xf32>
      %cst_15 = arith.constant dense<0.000000e+00> : vector<32x128xf32>
      %17 = tpu.matmul %15, %16, %cst_15 {dimension_numbers = #tpu.dot_dimension_numbers<[1], [0], [0], [1], [0, 0, 1, 1], [], []>} : vector<32x32xf32>, vector<32x128xf32>, vector<32x128xf32> -> vector<32x128xf32>
      %c0_16 = arith.constant 0 : index
      %c0_17 = arith.constant 0 : index
      %18 = vector.load %arg5[%c0_16, %c0_17] : memref<1x128xf32, #tpu.memory_space<vmem>>, vector<1x128xf32>
      %19 = vector.broadcast %18 : vector<1x128xf32> to vector<32x128xf32>
      %20 = arith.addf %17, %19 : vector<32x128xf32>
      %c0_18 = arith.constant 0 : index
      %c0_19 = arith.constant 0 : index
      %21 = vector.load %arg6[%c0_18, %c0_19] : memref<32x128xf32, #tpu.memory_space<vmem>>, vector<32x128xf32>
      tpu.vector_store %arg6[%c0_18, %c0_19], %20 {strides = array<i32>} : memref<32x128xf32, #tpu.memory_space<vmem>>, vector<32x128xf32>,
    } else {
    }
    return
  }
  func.func @transform_0(%arg0: i32, %arg1: i32) -> (i32, i32) {
    %c0_i32 = arith.constant 0 : i32
    return %arg0, %arg1 : i32, i32
  }
  func.func @transform_1(%arg0: i32, %arg1: i32) -> (i32, i32) {
    %c0_i32 = arith.constant 0 : i32
    %c0_i32_0 = arith.constant 0 : i32
    return %arg1, %c0_i32 : i32, i32
  }
  func.func @transform_2(%arg0: i32, %arg1: i32) -> (i32, i32) {
    %c0_i32 = arith.constant 0 : i32
    %c0_i32_0 = arith.constant 0 : i32
    %c0_i32_1 = arith.constant 0 : i32
    return %c0_i32, %c0_i32_0 : i32, i32
  }
  func.func @transform_3(%arg0: i32, %arg1: i32) -> (i32, i32) {
    %c0_i32 = arith.constant 0 : i32
    %c0_i32_0 = arith.constant 0 : i32
    %c0_i32_1 = arith.constant 0 : i32
    return %c0_i32, %c0_i32_0 : i32, i32
  }
  func.func @transform_4(%arg0: i32, %arg1: i32) -> (i32, i32) {
    %c0_i32 = arith.constant 0 : i32
    %c0_i32_0 = arith.constant 0 : i32
    return %arg0, %c0_i32 : i32, i32
  }
}

</mosaic_0001>

<llo_original>
// kernel: tpu_custom_call.1
$region0: #{tpu_custom_call.1}
  #allocation0 [shape = 'u32[]', space=smem, size = 0x4, offset = 0x4, fixed_abs, tag = 'smem constant byte address 0x4 - core index']
  #allocation1 [shape = 'u32[144,128]{1,0:T(1,128)}', space=vmem, size = 0x12000, scoped, tag = 'internal scratch']
  #allocation2 [shape = 'f32[32,32]{1,0:T(8,128)}', space=vmem, size = 0x4000, scoped, tag = 'scratch operand']
  %s0 = inlined_call_operand.vmem [shape: s8[32,128], index: 0, kind: input, shape index: {}]
  %s1 = inlined_call_operand.vmem [shape: f32[128,32], index: 1, kind: input, shape index: {}]
  %s2 = inlined_call_operand.vmem [shape: f32[32,128], index: 2, kind: input, shape index: {}]
  %s3 = inlined_call_operand.vmem [shape: f32[1,128], index: 3, kind: input, shape index: {}]
  %s4 = inlined_call_operand.hbm [shape: f32[32,128], index: 4, kind: output, shape index: {}]
  %s5 = sld [smem:[#allocation0]]
  $region34: #{tpu_custom_call.1} parent=0
    _
  %s7 = ssub.s32 1, %s5
  %s8 = scalar_select 0, %s7, %s5
  $region1: #{tpu_custom_call.1} parent=0
    #allocation3 [shape = 'u8[16384]{0}', space=vmem, size = 0x4000, scoped, tag = 'output window, operand 0, single buffered']
    #allocation4 [shape = 's32[1]{0}', space=sflag, size = 0x4, scoped, tag = 'scoped memory for tpu_custom_call.1']
    %9 = vsyncpa [#allocation4], 0
    // Predicated region
    $region2: #{tpu_custom_call.1} parent=1 // pred_check
      _
    $region3: #{tpu_custom_call.1} parent=1 // pred_check_branch
      %11 = sbr.rel (0) target = $region5
    $region4: #{tpu_custom_call.1} parent=1 // pred_region
      _
    $region5: #{tpu_custom_call.1} parent=1 // pred_fallthru
      _
    // Predicated region
    $region6: #{tpu_custom_call.1} parent=1 // pred_check
      _
    $region7: #{tpu_custom_call.1} parent=1 // pred_check_branch
      %13 = sbr.rel (0) target = $region9
    $region8: #{tpu_custom_call.1} parent=1 // pred_region
      _
    $region9: #{tpu_custom_call.1} parent=1 // pred_fallthru
      _
    // Predicated region
    $region10: #{tpu_custom_call.1} parent=1 // pred_check
      _
    $region11: #{tpu_custom_call.1} parent=1 // pred_check_branch
      %15 = sbr.rel (0) target = $region13
    $region12: #{tpu_custom_call.1} parent=1 // pred_region
      _
    $region13: #{tpu_custom_call.1} parent=1 // pred_fallthru
      _
    // Predicated region
    $region14: #{tpu_custom_call.1} parent=1 // pred_check
      _
    $region15: #{tpu_custom_call.1} parent=1 // pred_check_branch
      %17 = sbr.rel (0) target = $region17
    $region16: #{tpu_custom_call.1} parent=1 // pred_region
      _
    $region17: #{tpu_custom_call.1} parent=1 // pred_fallthru
      _
    %p18 = scmp.eq.s32.totalorder 0, 0
    // Predicated region
    $region18: #{tpu_custom_call.1} parent=1 // pred_check
      %p19 = pneg %p18
    $region19: #{tpu_custom_call.1} parent=1 // pred_check_branch
      %21 = sbr.rel (%p19) target = $region21
    $region20: #{tpu_custom_call.1} parent=1 // pred_region
      %vm22 = vcmask 261120
      %23 = vst.msk [vmem:[#allocation2] sm:$0xff] %vm22, 0.0
      %24 = vst.msk [vmem:[#allocation2 + $0x8] sm:$0xff] %vm22, 0.0
      %25 = vst.msk [vmem:[#allocation2 + $0x10] sm:$0xff] %vm22, 0.0
      %26 = vst.msk [vmem:[#allocation2 + $0x18] sm:$0xff] %vm22, 0.0
    $region21: #{tpu_custom_call.1} parent=1 // pred_fallthru
      _
    %v27 = vld [vmem:[%s0] sm:$0xff]
    %v28 = vunpack.c.0.s8 %v27
    %v29 = vunpack.c.1.s8 %v27
    %v30 = vunpack.c.2.s8 %v27
    %v31 = vunpack.c.3.s8 %v27
    %v32 = vcvt.s32.f32 %v28
    %v33 = vcvt.s32.f32 %v29
    %v34 = vcvt.s32.f32 %v30
    %v35 = vcvt.s32.f32 %v31
    %v36 = vld [vmem:[#allocation2] sm:$0xff]
    %v37 = vld [vmem:[#allocation2 + $0x8] sm:$0xff]
    %v38 = vld [vmem:[#allocation2 + $0x10] sm:$0xff]
    %v39 = vld [vmem:[#allocation2 + $0x18] sm:$0xff]
    %v40 = vld [vmem:[%s1] sm:$0xff]
    %v41 = vld [vmem:[%s1 + $0x8] sm:$0xff]
    %v42 = vld [vmem:[%s1 + $0x10] sm:$0xff]
    %v43 = vld [vmem:[%s1 + $0x18] sm:$0xff]
    %v44 = vld [vmem:[%s1 + $0x20] sm:$0xff]
    %v45 = vld [vmem:[%s1 + $0x28] sm:$0xff]
    %v46 = vld [vmem:[%s1 + $0x30] sm:$0xff]
    %v47 = vld [vmem:[%s1 + $0x38] sm:$0xff]
    %v48 = vld [vmem:[%s1 + $0x40] sm:$0xff]
    %v49 = vld [vmem:[%s1 + $0x48] sm:$0xff]
    %v50 = vld [vmem:[%s1 + $0x50] sm:$0xff]
    %v51 = vld [vmem:[%s1 + $0x58] sm:$0xff]
    %v52 = vld [vmem:[%s1 + $0x60] sm:$0xff]
    %v53 = vld [vmem:[%s1 + $0x68] sm:$0xff]
    %v54 = vld [vmem:[%s1 + $0x70] sm:$0xff]
    %v55 = vld [vmem:[%s1 + $0x78] sm:$0xff]
    %56 = vmatprep.subr.mxu0 0.0
    %57 = vmatpush1.msra.mxu0 %v55
    %58 = vmatprep.subr.mxu0 0.0
    %59 = vmatpush1.msra.mxu0 %v54
    %60 = vmatprep.subr.mxu0 0.0
    %61 = vmatpush1.msra.mxu0 %v53
    %62 = vmatprep.subr.mxu0 0.0
    %63 = vmatpush1.msra.mxu0 %v52
    %64 = vmatprep.subr.mxu0 0.0
    %65 = vmatpush1.msra.mxu0 %v51
    %66 = vmatprep.subr.mxu0 0.0
    %67 = vmatpush1.msra.mxu0 %v50
    %68 = vmatprep.subr.mxu0 0.0
    %69 = vmatpush1.msra.mxu0 %v49
    %70 = vmatprep.subr.mxu0 0.0
    %71 = vmatpush1.msra.mxu0 %v48
    %72 = vmatprep.subr.mxu0 0.0
    %73 = vmatpush1.msra.mxu0 %v47
    %74 = vmatprep.subr.mxu0 0.0
    %75 = vmatpush1.msra.mxu0 %v46
    %76 = vmatprep.subr.mxu0 0.0
    %77 = vmatpush1.msra.mxu0 %v45
    %78 = vmatprep.subr.mxu0 0.0
    %79 = vmatpush1.msra.mxu0 %v44
    %80 = vmatprep.subr.mxu0 0.0
    %81 = vmatpush1.msra.mxu0 %v43
    %82 = vmatprep.subr.mxu0 0.0
    %83 = vmatpush1.msra.mxu0 %v42
    %84 = vmatprep.subr.mxu0 0.0
    %85 = vmatpush1.msra.mxu0 %v41
    %86 = vmatprep.subr.mxu0 0.0
    %87 = vmatpush1.msra.mxu0 %v40
    %88 = vmatprep.subr.mxu0 0.0
    %89 = vmatpush2.msra.mxu0 0.0
    %90 = vmatprep.subr.mxu0 0.0
    %91 = vmatpush2.msra.mxu0 0.0
    %92 = vmatprep.subr.mxu0 0.0
    %93 = vmatpush2.msra.mxu0 0.0
    %94 = vmatprep.subr.mxu0 0.0
    %95 = vmatpush2.msra.mxu0 0.0
    %96 = vmatprep.subr.mxu0 0.0
    %97 = vmatpush2.msra.mxu0 0.0
    %98 = vmatprep.subr.mxu0 0.0
    %99 = vmatpush2.msra.mxu0 0.0
    %100 = vmatprep.subr.mxu0 0.0
    %101 = vmatpush2.msra.mxu0 0.0
    %102 = vmatprep.subr.mxu0 0.0
    %103 = vmatpush2.msra.mxu0 0.0
    %104 = vmatprep.subr.mxu0 0.0
    %105 = vmatpush2.msra.mxu0 0.0
    %106 = vmatprep.subr.mxu0 0.0
    %107 = vmatpush2.msra.mxu0 0.0
    %108 = vmatprep.subr.mxu0 0.0
    %109 = vmatpush2.msra.mxu0 0.0
    %110 = vmatprep.subr.mxu0 0.0
    %111 = vmatpush2.msra.mxu0 0.0
    %112 = vmatprep.subr.mxu0 0.0
    %113 = vmatpush2.msra.mxu0 0.0
    %114 = vmatprep.subr.mxu0 0.0
    %115 = vmatpush2.msra.mxu0 0.0
    %116 = vmatprep.subr.mxu0 0.0
    %117 = vmatpush2.msra.mxu0 0.0
    %118 = vmatprep.subr.mxu0 0.0
    %119 = vmatpush2.msra.mxu0 0.0
    %120 = vmatprep.mubr.f32.mxu0 0.0
    %121 = vmatmul.mubr.f32.gmra.mxu0 %v32
    %v122 = vpop.f32.mrf.mxu0
    %v123 = vadd.f32 0.0, %v122
    %v124 = vpop.f32.mrf.mxu0
    %125 = vmatprep.mubr.f32.mxu0 0.0
    %126 = vmatmul.mubr.f32.gmra.mxu0 %v33
    %v127 = vpop.f32.mrf.mxu0
    %v128 = vadd.f32 0.0, %v127
    %v129 = vpop.f32.mrf.mxu0
    %130 = vmatprep.mubr.f32.mxu0 0.0
    %131 = vmatmul.mubr.f32.gmra.mxu0 %v34
    %v132 = vpop.f32.mrf.mxu0
    %v133 = vadd.f32 0.0, %v132
    %v134 = vpop.f32.mrf.mxu0
    %135 = vmatprep.mubr.f32.mxu0 0.0
    %136 = vmatmul.mubr.f32.gmra.mxu0 %v35
    %v137 = vpop.f32.mrf.mxu0
    %v138 = vadd.f32 0.0, %v137
    %v139 = vpop.f32.mrf.mxu0
    %140 = vdwg.mxu0
    %v141 = vadd.f32 %v36, %v123
    %v142 = vadd.f32 %v37, %v128
    %v143 = vadd.f32 %v38, %v133
    %v144 = vadd.f32 %v39, %v138
    %vm145 = vcmask 261120
    %146 = vst.msk [vmem:[#allocation2] sm:$0xff] %vm145, %v141
    %147 = vst.msk [vmem:[#allocation2 + $0x8] sm:$0xff] %vm145, %v142
    %148 = vst.msk [vmem:[#allocation2 + $0x10] sm:$0xff] %vm145, %v143
    %149 = vst.msk [vmem:[#allocation2 + $0x18] sm:$0xff] %vm145, %v144
    // Predicated region
    $region22: #{tpu_custom_call.1} parent=1 // pred_check
      %p150 = pneg %p18
    $region23: #{tpu_custom_call.1} parent=1 // pred_check_branch
      %152 = sbr.rel (%p150) target = $region25
    $region24: #{tpu_custom_call.1} parent=1 // pred_region
      %v153 = vld [vmem:[#allocation2] sm:$0xff]
      %v154 = vld [vmem:[#allocation2 + $0x8] sm:$0xff]
      %v155 = vld [vmem:[#allocation2 + $0x10] sm:$0xff]
      %v156 = vld [vmem:[#allocation2 + $0x18] sm:$0xff]
      %v157 = vmul.f32 %v153, 0.125
      %v158 = vmul.f32 %v154, 0.125
      %v159 = vmul.f32 %v155, 0.125
      %v160 = vmul.f32 %v156, 0.125
      %v161 = vld [vmem:[%s2] sm:$0xff]
      %v162 = vld [vmem:[%s2 + $0x8] sm:$0xff]
      %v163 = vld [vmem:[%s2 + $0x10] sm:$0xff]
      %v164 = vld [vmem:[%s2 + $0x18] sm:$0xff]
      %v165 = vld [vmem:[%s3] sm:$0x1]
      %v167 = vlaneseq
      %v168 = vshrl.u32 %v167, 7
      %v169 = vsub.s32 0, %v168
      %v170 = vrot.slane %v165, %v169
      %v173 = vsel %vm145, %v157, 0
      %v176 = vsel %vm145, %v158, 0
      %v179 = vsel %vm145, %v159, 0
      %v182 = vsel %vm145, %v160, 0
      %184 = vmatprep.subr.mxu0 0.0
      %185 = vmatpush1.msra.mxu0 0.0
      %186 = vmatprep.subr.mxu0 0.0
      %187 = vmatpush1.msra.mxu0 0.0
      %188 = vmatprep.subr.mxu0 0.0
      %189 = vmatpush1.msra.mxu0 0.0
      %190 = vmatprep.subr.mxu0 0.0
      %191 = vmatpush1.msra.mxu0 0.0
      %192 = vmatprep.subr.mxu0 0.0
      %193 = vmatpush1.msra.mxu0 0.0
      %194 = vmatprep.subr.mxu0 0.0
      %195 = vmatpush1.msra.mxu0 0.0
      %196 = vmatprep.subr.mxu0 0.0
      %197 = vmatpush1.msra.mxu0 0.0
      %198 = vmatprep.subr.mxu0 0.0
      %199 = vmatpush1.msra.mxu0 0.0
      %200 = vmatprep.subr.mxu0 0.0
      %201 = vmatpush1.msra.mxu0 0.0
      %202 = vmatprep.subr.mxu0 0.0
      %203 = vmatpush1.msra.mxu0 0.0
      %204 = vmatprep.subr.mxu0 0.0
      %205 = vmatpush1.msra.mxu0 0.0
      %206 = vmatprep.subr.mxu0 0.0
      %207 = vmatpush1.msra.mxu0 0.0
      %208 = vmatprep.subr.mxu0 0.0
      %209 = vmatpush1.msra.mxu0 %v164
      %210 = vmatprep.subr.mxu0 0.0
      %211 = vmatpush1.msra.mxu0 %v163
      %212 = vmatprep.subr.mxu0 0.0
      %213 = vmatpush1.msra.mxu0 %v162
      %214 = vmatprep.subr.mxu0 0.0
      %215 = vmatpush1.msra.mxu0 %v161
      %216 = vmatprep.subr.mxu0 0.0
      %217 = vmatpush2.msra.mxu0 0.0
      %218 = vmatprep.subr.mxu0 0.0
      %219 = vmatpush2.msra.mxu0 0.0
      %220 = vmatprep.subr.mxu0 0.0
      %221 = vmatpush2.msra.mxu0 0.0
      %222 = vmatprep.subr.mxu0 0.0
      %223 = vmatpush2.msra.mxu0 0.0
      %224 = vmatprep.subr.mxu0 0.0
      %225 = vmatpush2.msra.mxu0 0.0
      %226 = vmatprep.subr.mxu0 0.0
      %227 = vmatpush2.msra.mxu0 0.0
      %228 = vmatprep.subr.mxu0 0.0
      %229 = vmatpush2.msra.mxu0 0.0
      %230 = vmatprep.subr.mxu0 0.0
      %231 = vmatpush2.msra.mxu0 0.0
      %232 = vmatprep.subr.mxu0 0.0
      %233 = vmatpush2.msra.mxu0 0.0
      %234 = vmatprep.subr.mxu0 0.0
      %235 = vmatpush2.msra.mxu0 0.0
      %236 = vmatprep.subr.mxu0 0.0
      %237 = vmatpush2.msra.mxu0 0.0
      %238 = vmatprep.subr.mxu0 0.0
      %239 = vmatpush2.msra.mxu0 0.0
      %240 = vmatprep.subr.mxu0 0.0
      %241 = vmatpush2.msra.mxu0 0.0
      %242 = vmatprep.subr.mxu0 0.0
      %243 = vmatpush2.msra.mxu0 0.0
      %244 = vmatprep.subr.mxu0 0.0
      %245 = vmatpush2.msra.mxu0 0.0
      %246 = vmatprep.subr.mxu0 0.0
      %247 = vmatpush2.msra.mxu0 0.0
      %248 = vmatprep.mubr.f32.mxu0 0.0
      %249 = vmatmul.mubr.f32.gmra.mxu0 %v173
      %v250 = vpop.f32.mrf.mxu0
      %v251 = vadd.f32 %v170, %v250
      %v252 = vpop.f32.mrf.mxu0
      %253 = vmatprep.mubr.f32.mxu0 0.0
      %254 = vmatmul.mubr.f32.gmra.mxu0 %v176
      %v255 = vpop.f32.mrf.mxu0
      %v256 = vadd.f32 %v170, %v255
      %v257 = vpop.f32.mrf.mxu0
      %258 = vmatprep.mubr.f32.mxu0 0.0
      %259 = vmatmul.mubr.f32.gmra.mxu0 %v179
      %v260 = vpop.f32.mrf.mxu0
      %v261 = vadd.f32 %v170, %v260
      %v262 = vpop.f32.mrf.mxu0
      %263 = vmatprep.mubr.f32.mxu0 0.0
      %264 = vmatmul.mubr.f32.gmra.mxu0 %v182
      %v265 = vpop.f32.mrf.mxu0
      %v266 = vadd.f32 %v170, %v265
      %v267 = vpop.f32.mrf.mxu0
      %268 = vdwg.mxu0
      %269 = vst [vmem:[#allocation3] sm:$0xff] %v251
      %270 = vst [vmem:[#allocation3 + $0x8] sm:$0xff] %v256
      %271 = vst [vmem:[#allocation3 + $0x10] sm:$0xff] %v261
      %272 = vst [vmem:[#allocation3 + $0x18] sm:$0xff] %v266
    $region25: #{tpu_custom_call.1} parent=1 // pred_fallthru
      _
    // Predicated region
    $region26: #{tpu_custom_call.1} parent=1 // pred_check
      _
    $region27: #{tpu_custom_call.1} parent=1 // pred_check_branch
      %274 = sbr.rel (0) target = $region29
    $region28: #{tpu_custom_call.1} parent=1 // pred_region
      %s276 = ssub.s32 512, 512
      %277 = vsyncadd [#allocation4], %s276
      %s278 = sshll.u32 [#allocation3], 4
      %s279 = int_to_ptr.vmem [resolvable:$true] %s278
      %284 = dma.vmem_to_hbm [thread:$0]  %s279, 512, %s4, [#allocation4], 128, 128, 8
    $region29: #{tpu_custom_call.1} parent=1 // pred_fallthru
      _
    // Predicated region
    $region30: #{tpu_custom_call.1} parent=1 // pred_check
      _
    $region31: #{tpu_custom_call.1} parent=1 // pred_check_branch
      %286 = sbr.rel (0) target = $region33
    $region32: #{tpu_custom_call.1} parent=1 // pred_region
      %287 = dma.done [#allocation4], 512
    $region33: #{tpu_custom_call.1} parent=1 // pred_fallthru
      _
    %288 = vsyncpa [#allocation4], 1

</llo_original>
